<compile_context>
chip_gen: v7x
topology: tpu7x:2x2x1
jax: 0.10.0
libtpu: 0.0.40
codegen_flags: <defaults>
</compile_context>

<pallas_src>
import functools

import jax
import jax.numpy as jnp
from jax.experimental import pallas as pl
from jax.experimental.pallas import tpu as pltpu

LANE = 128


def _round_up(n, m):
    return ((n + m - 1) // m) * m


def _mlp_logsoftmax_kernel(x_ref, w1_ref, b1_ref, w2_ref, b2_ref, o_ref,
                           *, num_classes, use_bf16_mxu):
    x = x_ref[...]
    w1 = w1_ref[...]
    w2 = w2_ref[...]
    if use_bf16_mxu:
        x = x.astype(jnp.bfloat16)
        w1 = w1.astype(jnp.bfloat16)
        w2 = w2.astype(jnp.bfloat16)

    # fc1 + ReLU (MXU matmul, f32 accumulate; bias/ReLU in f32).
    # Hidden dim is zero-padded to 128 lanes in the wrapper -> lane-dense h.
    h = jnp.dot(x, w1, preferred_element_type=jnp.float32) + b1_ref[...]
    h = jnp.maximum(h, 0.0)
    if use_bf16_mxu:
        h = h.astype(jnp.bfloat16)

    # fc5 over a lane-dense 128-wide padded class dim. Padded W2 columns are
    # zero and padded b2 lanes are -1e30, so padded logits are exactly -1e30:
    # no in-kernel masking needed; exp underflows to 0 and max is unaffected.
    logits = jnp.dot(h, w2, preferred_element_type=jnp.float32) + b2_ref[...]

    # Numerically stable log_softmax over the padded class axis.
    m = jnp.max(logits, axis=-1, keepdims=True)
    shifted = logits - m
    lse = jnp.log(jnp.sum(jnp.exp(shifted), axis=-1, keepdims=True))

    # Store ONLY the real classes; padded lanes never hit HBM.
    o_ref[...] = (shifted - lse)[:, :num_classes].astype(o_ref.dtype)


def custom_image_model_forward(x, w1, b1, w2, b2, *,
                               block_batch=2048, use_bf16_mxu=False,
                               out_dtype=jnp.float32):
    """x: (B, F) f32; w1: (F, 64); b1: (64,); w2: (64, C); b2: (C,)."""
    B, F = x.shape
    H = w1.shape[1]
    C = w2.shape[1]

    # Lane-dense padding of hidden (64 -> 128) and classes (C -> 128).
    HP = _round_up(H, LANE)
    CP = _round_up(C, LANE)
    w1p = jnp.pad(w1, ((0, 0), (0, HP - H)))                       # (F, HP)
    b1p = jnp.pad(b1.reshape(1, H), ((0, 0), (0, HP - H)))         # (1, HP)
    w2p = jnp.pad(w2, ((0, HP - H), (0, CP - C)))                  # (HP, CP)
    # Class mask baked into the bias: padded lanes get -1e30.
    b2p = jnp.concatenate(
        [b2.reshape(1, C),
         jnp.full((1, CP - C), -1e30, dtype=b2.dtype)], axis=1)    # (1, CP)

    # Batch tile: big enough to amortize ~0.35us/step overhead, multiple of 8.
    TB = min(block_batch, _round_up(B, 8))
    # Keep >= 4 batch tiles at large B (2 per TensorCore on v7x megacore,
    # preserving DMA/compute overlap per core).
    if B >= 4 * 256 and pl.cdiv(B, TB) < 4:
        TB = max(8, _round_up(pl.cdiv(B, 4), 8))
    # VMEM-aware clamp (v7x scoped default ~32 MiB; leave headroom). Counts
    # double-buffered x-in + compact-out streams plus resident weights.
    vmem_budget = 24 * 1024 * 1024
    weights_bytes = 2 * (F * HP + HP * CP + HP + CP) * 4
    per_row_bytes = 2 * (F + C) * 4
    max_tb = max(8, ((vmem_budget - weights_bytes) // max(per_row_bytes, 1)) // 8 * 8)
    TB = min(TB, max_tb)
    # TODO(synk): for very large feature_size, add a K-grid axis over F with an
    # f32 accumulator scratch instead of holding the full (TB, F) x tile.

    grid = (pl.cdiv(B, TB),)

    kernel = functools.partial(
        _mlp_logsoftmax_kernel, num_classes=C, use_bf16_mxu=use_bf16_mxu)

    out = pl.pallas_call(
        kernel,
        out_shape=jax.ShapeDtypeStruct((B, C), out_dtype),
        grid=grid,
        in_specs=[
            # Streamed per batch tile.
            pl.BlockSpec((TB, F), lambda i: (i, 0)),
            # Weights/biases resident in VMEM across all grid iterations.
            pl.BlockSpec((F, HP), lambda i: (0, 0)),
            pl.BlockSpec((1, HP), lambda i: (0, 0)),
            pl.BlockSpec((HP, CP), lambda i: (0, 0)),
            pl.BlockSpec((1, CP), lambda i: (0, 0)),
        ],
        # Compact output: full class dim (=C) per block, no padded writeback.
        out_specs=pl.BlockSpec((TB, C), lambda i: (i, 0)),
        compiler_params=pltpu.CompilerParams(
            dimension_semantics=("parallel",),  # shard batch tiles across TCs (v7x)
        ),
    )(x, w1p, b1p, w2p, b2p)

    return out


def init_params(key, feature_size, hidden, num_classes):
    # Deterministic synthetic init (mimics PyTorch Linear's uniform fan-in scaling).
    k1, k2, k3, k4 = jax.random.split(key, 4)
    bound1 = 1.0 / (feature_size ** 0.5)
    bound2 = 1.0 / (hidden ** 0.5)
    w1 = jax.random.uniform(k1, (feature_size, hidden), jnp.float32, -bound1, bound1)
    b1 = jax.random.uniform(k2, (hidden,), jnp.float32, -bound1, bound1)
    w2 = jax.random.uniform(k3, (hidden, num_classes), jnp.float32, -bound2, bound2)
    b2 = jax.random.uniform(k4, (num_classes,), jnp.float32, -bound2, bound2)
    return w1, b1, w2, b2


if __name__ == "__main__":
    batch = 8
    feature_size = 32
    hidden = 64          # fixed by the module (fc1 -> 64)
    num_classes = 10

    key = jax.random.PRNGKey(0)
    kx, kp = jax.random.split(key)
    x = jax.random.normal(kx, (batch, feature_size), jnp.float32)
    w1, b1, w2, b2 = init_params(kp, feature_size, hidden, num_classes)

    # Reference in plain JAX (same math as the PyTorch forward).
    h_ref = jnp.maximum(x @ w1 + b1[None, :], 0.0)
    ref = jax.nn.log_softmax(h_ref @ w2 + b2[None, :], axis=1)

    # f32 MXU path: faithful to the PyTorch f32 forward.
    out = custom_image_model_forward(x, w1, b1, w2, b2, use_bf16_mxu=False)
    out = jax.block_until_ready(out)
    assert out.shape == (batch, num_classes)
    assert jnp.allclose(out, ref, atol=1e-5, rtol=1e-5)

    # bf16 MXU path (v6e/v7x only; skip on v5e): relaxed tolerance.
    out_bf16 = custom_image_model_forward(x, w1, b1, w2, b2, use_bf16_mxu=True)
    out_bf16 = jax.block_until_ready(out_bf16)
    assert out_bf16.shape == (batch, num_classes)
    assert jnp.allclose(out_bf16, ref, atol=5e-2, rtol=5e-2)

    print("KERNEL_OK")
</pallas_src>

<mosaic_0001>
module attributes {stable_mosaic.version = 11 : i64} {
  func.func @_mlp_logsoftmax_kernel(%arg0: i32, %arg1: memref<8x32xf32, #tpu.memory_space<vmem>>, %arg2: memref<32x128xf32, #tpu.memory_space<vmem>>, %arg3: memref<1x128xf32, #tpu.memory_space<vmem>>, %arg4: memref<128x128xf32, #tpu.memory_space<vmem>>, %arg5: memref<1x128xf32, #tpu.memory_space<vmem>>, %arg6: memref<8x10xf32, #tpu.memory_space<vmem>>) attributes {dimension_semantics = [#tpu.dimension_semantics<parallel>], iteration_bounds = array<i64: 1>, scalar_prefetch = 0 : i64, scratch_operands = 0 : i64, tpu.core_type = #tpu.core_type<tc>, window_params = [{transform_indices = @transform_0, window_bounds = array<i64: 8, 32>}, {pipeline_mode = #tpu.pipeline_mode<synchronous>, transform_indices = @transform_1, window_bounds = array<i64: 32, 128>}, {pipeline_mode = #tpu.pipeline_mode<synchronous>, transform_indices = @transform_2, window_bounds = array<i64: 1, 128>}, {pipeline_mode = #tpu.pipeline_mode<synchronous>, transform_indices = @transform_3, window_bounds = array<i64: 128, 128>}, {pipeline_mode = #tpu.pipeline_mode<synchronous>, transform_indices = @transform_4, window_bounds = array<i64: 1, 128>}, {transform_indices = @transform_5, window_bounds = array<i64: 8, 10>}]} {
    %c0 = arith.constant 0 : index
    %c0_0 = arith.constant 0 : index
    %0 = vector.load %arg1[%c0, %c0_0] : memref<8x32xf32, #tpu.memory_space<vmem>>, vector<8x32xf32>
    %c0_1 = arith.constant 0 : index
    %c0_2 = arith.constant 0 : index
    %1 = vector.load %arg2[%c0_1, %c0_2] : memref<32x128xf32, #tpu.memory_space<vmem>>, vector<32x128xf32>
    %c0_3 = arith.constant 0 : index
    %c0_4 = arith.constant 0 : index
    %2 = vector.load %arg4[%c0_3, %c0_4] : memref<128x128xf32, #tpu.memory_space<vmem>>, vector<128x128xf32>
    %cst = arith.constant dense<0.000000e+00> : vector<8x128xf32>
    %3 = tpu.matmul %0, %1, %cst {dimension_numbers = #tpu.dot_dimension_numbers<[1], [0], [0], [1], [0, 0, 1, 1], [], []>} : vector<8x32xf32>, vector<32x128xf32>, vector<8x128xf32> -> vector<8x128xf32>
    %c0_5 = arith.constant 0 : index
    %c0_6 = arith.constant 0 : index
    %4 = vector.load %arg3[%c0_5, %c0_6] : memref<1x128xf32, #tpu.memory_space<vmem>>, vector<1x128xf32>
    %5 = vector.broadcast %4 : vector<1x128xf32> to vector<8x128xf32>
    %6 = arith.addf %3, %5 : vector<8x128xf32>
    %cst_7 = arith.constant 0.000000e+00 : f32
    %7 = vector.broadcast %cst_7 : f32 to vector<8x128xf32>
    %8 = arith.maximumf %6, %7 : vector<8x128xf32>
    %cst_8 = arith.constant dense<0.000000e+00> : vector<8x128xf32>
    %9 = tpu.matmul %8, %2, %cst_8 {dimension_numbers = #tpu.dot_dimension_numbers<[1], [0], [0], [1], [0, 0, 1, 1], [], []>} : vector<8x128xf32>, vector<128x128xf32>, vector<8x128xf32> -> vector<8x128xf32>
    %c0_9 = arith.constant 0 : index
    %c0_10 = arith.constant 0 : index
    %10 = vector.load %arg5[%c0_9, %c0_10] : memref<1x128xf32, #tpu.memory_space<vmem>>, vector<1x128xf32>
    %11 = vector.broadcast %10 : vector<1x128xf32> to vector<8x128xf32>
    %12 = arith.addf %9, %11 : vector<8x128xf32>
    %cst_11 = arith.constant dense<0xFF800000> : vector<8xf32>
    %13 = vector.multi_reduction <maximumf>, %12, %cst_11 [1] : vector<8x128xf32> to vector<8xf32>
    %14 = vector.shape_cast %13 : vector<8xf32> to vector<8x1xf32>
    %15 = vector.broadcast %14 : vector<8x1xf32> to vector<8x128xf32>
    %16 = arith.subf %12, %15 : vector<8x128xf32>
    %17 = math.exp %16 : vector<8x128xf32>
    %cst_12 = arith.constant dense<0.000000e+00> : vector<8xf32>
    %18 = vector.multi_reduction <add>, %17, %cst_12 [1] : vector<8x128xf32> to vector<8xf32>
    %19 = vector.shape_cast %18 : vector<8xf32> to vector<8x1xf32>
    %20 = math.log %19 : vector<8x1xf32>
    %21 = vector.broadcast %20 : vector<8x1xf32> to vector<8x128xf32>
    %22 = arith.subf %16, %21 : vector<8x128xf32>
    %23 = vector.extract_strided_slice %22 {offsets = [0, 0], sizes = [8, 10], strides = [1, 1]} : vector<8x128xf32> to vector<8x10xf32>
    %c0_13 = arith.constant 0 : index
    %c0_14 = arith.constant 0 : index
    %24 = vector.load %arg6[%c0_13, %c0_14] : memref<8x10xf32, #tpu.memory_space<vmem>>, vector<8x10xf32>
    tpu.vector_store %arg6[%c0_13, %c0_14], %23 {strides = array<i32>} : memref<8x10xf32, #tpu.memory_space<vmem>>, vector<8x10xf32>,
    return
  }
  func.func @transform_0(%arg0: i32) -> (i32, i32) {
    %c0_i32 = arith.constant 0 : i32
    %c0_i32_0 = arith.constant 0 : i32
    return %arg0, %c0_i32 : i32, i32
  }
  func.func @transform_1(%arg0: i32) -> (i32, i32) {
    %c0_i32 = arith.constant 0 : i32
    %c0_i32_0 = arith.constant 0 : i32
    %c0_i32_1 = arith.constant 0 : i32
    return %c0_i32, %c0_i32_0 : i32, i32
  }
  func.func @transform_2(%arg0: i32) -> (i32, i32) {
    %c0_i32 = arith.constant 0 : i32
    %c0_i32_0 = arith.constant 0 : i32
    %c0_i32_1 = arith.constant 0 : i32
    return %c0_i32, %c0_i32_0 : i32, i32
  }
  func.func @transform_3(%arg0: i32) -> (i32, i32) {
    %c0_i32 = arith.constant 0 : i32
    %c0_i32_0 = arith.constant 0 : i32
    %c0_i32_1 = arith.constant 0 : i32
    return %c0_i32, %c0_i32_0 : i32, i32
  }
  func.func @transform_4(%arg0: i32) -> (i32, i32) {
    %c0_i32 = arith.constant 0 : i32
    %c0_i32_0 = arith.constant 0 : i32
    %c0_i32_1 = arith.constant 0 : i32
    return %c0_i32, %c0_i32_0 : i32, i32
  }
  func.func @transform_5(%arg0: i32) -> (i32, i32) {
    %c0_i32 = arith.constant 0 : i32
    %c0_i32_0 = arith.constant 0 : i32
    return %arg0, %c0_i32 : i32, i32
  }
}

</mosaic_0001>

<llo_original>
// kernel: tpu_custom_call.1
$region0: #{tpu_custom_call.1}
  #allocation0 [shape = 'u32[]', space=smem, size = 0x4, offset = 0x4, fixed_abs, tag = 'smem constant byte address 0x4 - core index']
  #allocation1 [shape = 'u32[144,128]{1,0:T(1,128)}', space=vmem, size = 0x12000, scoped, tag = 'internal scratch']
  %s0 = inlined_call_operand.hbm [shape: f32[8,32], index: 0, kind: input, shape index: {}]
  %s1 = inlined_call_operand.hbm [shape: f32[32,128], index: 1, kind: input, shape index: {}]
  %s2 = inlined_call_operand.vmem [shape: f32[1,128], index: 2, kind: input, shape index: {}]
  %s3 = inlined_call_operand.hbm [shape: f32[128,128], index: 3, kind: input, shape index: {}]
  %s4 = inlined_call_operand.vmem [shape: f32[1,128], index: 4, kind: input, shape index: {}]
  %s5 = inlined_call_operand.hbm [shape: f32[8,10], index: 5, kind: output, shape index: {}]
  %s6 = sld [smem:[#allocation0]]
  $region42: #{tpu_custom_call.1} parent=0
    _
  %s8 = ssub.s32 1, %s6
  %s9 = scalar_select 0, %s8, %s6
  $region1: #{tpu_custom_call.1} parent=0
    #allocation2 [shape = 'u8[4096]{0}', space=vmem, size = 0x1000, scoped, tag = 'input window, operand 0, single buffered']
    #allocation3 [shape = 's32[1]{0}', space=sflag, size = 0x4, scoped, tag = 'scoped memory for tpu_custom_call.1']
    #allocation4 [shape = 's32[1]{0}', space=sflag, size = 0x4, scoped, tag = 'scoped memory for tpu_custom_call.1']
    #allocation5 [shape = 'u8[16384]{0}', space=vmem, size = 0x4000, scoped, tag = 'input window, operand 1, single buffered']
    #allocation6 [shape = 's32[1]{0}', space=sflag, size = 0x4, scoped, tag = 'scoped memory for tpu_custom_call.1']
    #allocation7 [shape = 'u8[65536]{0}', space=vmem, size = 0x10000, scoped, tag = 'input window, operand 3, single buffered']
    #allocation8 [shape = 'u8[4096]{0}', space=vmem, size = 0x1000, scoped, tag = 'output window, operand 0, single buffered']
    %10 = vsyncpa [#allocation3], 0
    %11 = vsyncpa [#allocation6], 0
    %12 = vsyncpa [#allocation4], 0
    // Predicated region
    $region2: #{tpu_custom_call.1} parent=1 // pred_check
      _
    $region3: #{tpu_custom_call.1} parent=1 // pred_check_branch
      %14 = sbr.rel (0) target = $region5
    $region4: #{tpu_custom_call.1} parent=1 // pred_region
      %s16 = ssub.s32 128, 128
      %17 = vsyncadd [#allocation3], %s16
      %s19 = sshll.u32 [#allocation2], 4
      %s20 = int_to_ptr.vmem [resolvable:$true] %s19
      %22 = dma.hbm_to_vmem [thread:$0]  %s0, 128, %s20, [#allocation3]
    $region5: #{tpu_custom_call.1} parent=1 // pred_fallthru
      _
    // Predicated region
    $region6: #{tpu_custom_call.1} parent=1 // pred_check
      _
    $region7: #{tpu_custom_call.1} parent=1 // pred_check_branch
      %24 = sbr.rel (0) target = $region9
    $region8: #{tpu_custom_call.1} parent=1 // pred_region
      %s26 = ssub.s32 512, 512
      %27 = vsyncadd [#allocation6], %s26
      %s28 = sshll.u32 [#allocation5], 4
      %s29 = int_to_ptr.vmem [resolvable:$true] %s28
      %34 = dma.hbm_to_vmem [thread:$0]  %s1, 512, %s29, [#allocation6], 128, 128, 8
    $region9: #{tpu_custom_call.1} parent=1 // pred_fallthru
      _
    // Predicated region
    $region10: #{tpu_custom_call.1} parent=1 // pred_check
      _
    $region11: #{tpu_custom_call.1} parent=1 // pred_check_branch
      %36 = sbr.rel (0) target = $region13
    $region12: #{tpu_custom_call.1} parent=1 // pred_region
      _
    $region13: #{tpu_custom_call.1} parent=1 // pred_fallthru
      _
    // Predicated region
    $region14: #{tpu_custom_call.1} parent=1 // pred_check
      _
    $region15: #{tpu_custom_call.1} parent=1 // pred_check_branch
      %38 = sbr.rel (0) target = $region17
    $region16: #{tpu_custom_call.1} parent=1 // pred_region
      %s40 = ssub.s32 2048, 2048
      %41 = vsyncadd [#allocation6], %s40
      %s42 = sshll.u32 [#allocation7], 4
      %s43 = int_to_ptr.vmem [resolvable:$true] %s42
      %48 = dma.hbm_to_vmem [thread:$0]  %s3, 2048, %s43, [#allocation6], 128, 128, 8
    $region17: #{tpu_custom_call.1} parent=1 // pred_fallthru
      _
    // Predicated region
    $region18: #{tpu_custom_call.1} parent=1 // pred_check
      _
    $region19: #{tpu_custom_call.1} parent=1 // pred_check_branch
      %50 = sbr.rel (0) target = $region21
    $region20: #{tpu_custom_call.1} parent=1 // pred_region
      _
    $region21: #{tpu_custom_call.1} parent=1 // pred_fallthru
      _
    // Predicated region
    $region22: #{tpu_custom_call.1} parent=1 // pred_check
      _
    $region23: #{tpu_custom_call.1} parent=1 // pred_check_branch
      %52 = sbr.rel (0) target = $region25
    $region24: #{tpu_custom_call.1} parent=1 // pred_region
      %53 = dma.done [#allocation3], 128
    $region25: #{tpu_custom_call.1} parent=1 // pred_fallthru
      _
    // Predicated region
    $region26: #{tpu_custom_call.1} parent=1 // pred_check
      _
    $region27: #{tpu_custom_call.1} parent=1 // pred_check_branch
      %55 = sbr.rel (0) target = $region29
    $region28: #{tpu_custom_call.1} parent=1 // pred_region
      %56 = dma.done [#allocation6], 512
    $region29: #{tpu_custom_call.1} parent=1 // pred_fallthru
      _
    // Predicated region
    $region30: #{tpu_custom_call.1} parent=1 // pred_check
      _
    $region31: #{tpu_custom_call.1} parent=1 // pred_check_branch
      %58 = sbr.rel (0) target = $region33
    $region32: #{tpu_custom_call.1} parent=1 // pred_region
      %59 = dma.done [#allocation6], 2048
    $region33: #{tpu_custom_call.1} parent=1 // pred_fallthru
      _
    %v60 = vld [vmem:[#allocation2] sm:$0xff]
    %v61 = vld [vmem:[#allocation5] sm:$0xff]
    %v62 = vld [vmem:[#allocation5 + $0x8] sm:$0xff]
    %v63 = vld [vmem:[#allocation5 + $0x10] sm:$0xff]
    %v64 = vld [vmem:[#allocation5 + $0x18] sm:$0xff]
    %v65 = vld [vmem:[#allocation7] sm:$0xff]
    %v66 = vld [vmem:[#allocation7 + $0x8] sm:$0xff]
    %v67 = vld [vmem:[#allocation7 + $0x10] sm:$0xff]
    %v68 = vld [vmem:[#allocation7 + $0x18] sm:$0xff]
    %v69 = vld [vmem:[#allocation7 + $0x20] sm:$0xff]
    %v70 = vld [vmem:[#allocation7 + $0x28] sm:$0xff]
    %v71 = vld [vmem:[#allocation7 + $0x30] sm:$0xff]
    %v72 = vld [vmem:[#allocation7 + $0x38] sm:$0xff]
    %v73 = vld [vmem:[#allocation7 + $0x40] sm:$0xff]
    %v74 = vld [vmem:[#allocation7 + $0x48] sm:$0xff]
    %v75 = vld [vmem:[#allocation7 + $0x50] sm:$0xff]
    %v76 = vld [vmem:[#allocation7 + $0x58] sm:$0xff]
    %v77 = vld [vmem:[#allocation7 + $0x60] sm:$0xff]
    %v78 = vld [vmem:[#allocation7 + $0x68] sm:$0xff]
    %v79 = vld [vmem:[#allocation7 + $0x70] sm:$0xff]
    %v80 = vld [vmem:[#allocation7 + $0x78] sm:$0xff]
    %v81 = vld [vmem:[%s2] sm:$0x1]
    %v83 = vlaneseq
    %v84 = vshrl.u32 %v83, 7
    %v85 = vsub.s32 0, %v84
    %v86 = vrot.slane %v81, %v85
    %vm88 = vcmask 261120
    %v90 = vsel %vm88, %v60, 0
    %92 = vmatprep.subr.mxu0 0.0
    %93 = vmatpush1.msra.mxu0 %v61
    %94 = vmatprep.subr.mxu0 0.0
    %95 = vmatpush1.msra.mxu0 %v62
    %96 = vmatprep.subr.mxu0 0.0
    %97 = vmatpush1.msra.mxu0 %v63
    %98 = vmatprep.subr.mxu0 0.0
    %99 = vmatpush1.msra.mxu0 %v64
    %100 = vmatprep.subr.mxu0 0.0
    %101 = vmatpush1.msra.mxu0 0.0
    %102 = vmatprep.subr.mxu0 0.0
    %103 = vmatpush1.msra.mxu0 0.0
    %104 = vmatprep.subr.mxu0 0.0
    %105 = vmatpush1.msra.mxu0 0.0
    %106 = vmatprep.subr.mxu0 0.0
    %107 = vmatpush1.msra.mxu0 0.0
    %108 = vmatprep.subr.mxu0 0.0
    %109 = vmatpush1.msra.mxu0 0.0
    %110 = vmatprep.subr.mxu0 0.0
    %111 = vmatpush1.msra.mxu0 0.0
    %112 = vmatprep.subr.mxu0 0.0
    %113 = vmatpush1.msra.mxu0 0.0
    %114 = vmatprep.subr.mxu0 0.0
    %115 = vmatpush1.msra.mxu0 0.0
    %116 = vmatprep.subr.mxu0 0.0
    %117 = vmatpush1.msra.mxu0 0.0
    %118 = vmatprep.subr.mxu0 0.0
    %119 = vmatpush1.msra.mxu0 0.0
    %120 = vmatprep.subr.mxu0 0.0
    %121 = vmatpush1.msra.mxu0 0.0
    %122 = vmatprep.subr.mxu0 0.0
    %123 = vmatpush1.msra.mxu0 0.0
    %124 = vmatprep.subr.mxu0 0.0
    %125 = vmatpush1.msra.mxu0 0.0
    %126 = vmatprep.subr.mxu0 0.0
    %127 = vmatpush1.msra.mxu0 0.0
    %128 = vmatprep.subr.mxu0 0.0
    %129 = vmatpush1.msra.mxu0 0.0
    %130 = vmatprep.subr.mxu0 0.0
    %131 = vmatpush1.msra.mxu0 0.0
    %132 = vmatprep.subr.mxu0 0.0
    %133 = vmatpush1.msra.mxu0 0.0
    %134 = vmatprep.subr.mxu0 0.0
    %135 = vmatpush1.msra.mxu0 0.0
    %136 = vmatprep.subr.mxu0 0.0
    %137 = vmatpush1.msra.mxu0 0.0
    %138 = vmatprep.subr.mxu0 0.0
    %139 = vmatpush1.msra.mxu0 0.0
    %140 = vmatprep.subr.mxu0 0.0
    %141 = vmatpush1.msra.mxu0 0.0
    %142 = vmatprep.subr.mxu0 0.0
    %143 = vmatpush1.msra.mxu0 0.0
    %144 = vmatprep.subr.mxu0 0.0
    %145 = vmatpush1.msra.mxu0 0.0
    %146 = vmatprep.subr.mxu0 0.0
    %147 = vmatpush1.msra.mxu0 0.0
    %148 = vmatprep.subr.mxu0 0.0
    %149 = vmatpush1.msra.mxu0 0.0
    %150 = vmatprep.subr.mxu0 0.0
    %151 = vmatpush1.msra.mxu0 0.0
    %152 = vmatprep.subr.mxu0 0.0
    %153 = vmatpush1.msra.mxu0 0.0
    %154 = vmatprep.subr.mxu0 0.0
    %155 = vmatpush1.msra.mxu0 0.0
    %156 = vmatprep.mubr.f32.mxu0 0.0
    %157 = vmatmul.mubr.f32.gmra.mrb[0].mxu0 %v90
    %v158 = vpop.f32.mrb[0].mxu0
    %v159 = vadd.f32 %v86, %v158
    %v160 = vpop.f32.mrb[0].mxu0
    %161 = vdwg.mxu0
    %v162 = vmax.f32 %v159, 0.0
    %v163 = vld [vmem:[%s4] sm:$0x1]
    %v165 = vlaneseq
    %v166 = vshrl.u32 %v165, 7
    %v167 = vsub.s32 0, %v166
    %v168 = vrot.slane %v163, %v167
    %170 = vmatprep.subr.mxu0 0.0
    %171 = vmatpush1.msra.mxu0 %v65
    %172 = vmatprep.subr.mxu0 0.0
    %173 = vmatpush1.msra.mxu0 %v66
    %174 = vmatprep.subr.mxu0 0.0
    %175 = vmatpush1.msra.mxu0 %v67
    %176 = vmatprep.subr.mxu0 0.0
    %177 = vmatpush1.msra.mxu0 %v68
    %178 = vmatprep.subr.mxu0 0.0
    %179 = vmatpush1.msra.mxu0 %v69
    %180 = vmatprep.subr.mxu0 0.0
    %181 = vmatpush1.msra.mxu0 %v70
    %182 = vmatprep.subr.mxu0 0.0
    %183 = vmatpush1.msra.mxu0 %v71
    %184 = vmatprep.subr.mxu0 0.0
    %185 = vmatpush1.msra.mxu0 %v72
    %186 = vmatprep.subr.mxu0 0.0
    %187 = vmatpush1.msra.mxu0 %v73
    %188 = vmatprep.subr.mxu0 0.0
    %189 = vmatpush1.msra.mxu0 %v74
    %190 = vmatprep.subr.mxu0 0.0
    %191 = vmatpush1.msra.mxu0 %v75
    %192 = vmatprep.subr.mxu0 0.0
    %193 = vmatpush1.msra.mxu0 %v76
    %194 = vmatprep.subr.mxu0 0.0
    %195 = vmatpush1.msra.mxu0 %v77
    %196 = vmatprep.subr.mxu0 0.0
    %197 = vmatpush1.msra.mxu0 %v78
    %198 = vmatprep.subr.mxu0 0.0
    %199 = vmatpush1.msra.mxu0 %v79
    %200 = vmatprep.subr.mxu0 0.0
    %201 = vmatpush1.msra.mxu0 %v80
    %202 = vmatprep.subr.mxu0 0.0
    %203 = vmatpush1.msra.mxu0 0.0
    %204 = vmatprep.subr.mxu0 0.0
    %205 = vmatpush1.msra.mxu0 0.0
    %206 = vmatprep.subr.mxu0 0.0
    %207 = vmatpush1.msra.mxu0 0.0
    %208 = vmatprep.subr.mxu0 0.0
    %209 = vmatpush1.msra.mxu0 0.0
    %210 = vmatprep.subr.mxu0 0.0
    %211 = vmatpush1.msra.mxu0 0.0
    %212 = vmatprep.subr.mxu0 0.0
    %213 = vmatpush1.msra.mxu0 0.0
    %214 = vmatprep.subr.mxu0 0.0
    %215 = vmatpush1.msra.mxu0 0.0
    %216 = vmatprep.subr.mxu0 0.0
    %217 = vmatpush1.msra.mxu0 0.0
    %218 = vmatprep.subr.mxu0 0.0
    %219 = vmatpush1.msra.mxu0 0.0
    %220 = vmatprep.subr.mxu0 0.0
    %221 = vmatpush1.msra.mxu0 0.0
    %222 = vmatprep.subr.mxu0 0.0
    %223 = vmatpush1.msra.mxu0 0.0
    %224 = vmatprep.subr.mxu0 0.0
    %225 = vmatpush1.msra.mxu0 0.0
    %226 = vmatprep.subr.mxu0 0.0
    %227 = vmatpush1.msra.mxu0 0.0
    %228 = vmatprep.subr.mxu0 0.0
    %229 = vmatpush1.msra.mxu0 0.0
    %230 = vmatprep.subr.mxu0 0.0
    %231 = vmatpush1.msra.mxu0 0.0
    %232 = vmatprep.subr.mxu0 0.0
    %233 = vmatpush1.msra.mxu0 0.0
    %234 = vmatprep.mubr.f32.mxu0 0.0
    %235 = vmatmul.mubr.f32.gmra.mrb[0].mxu0 %v162
    %v236 = vpop.f32.mrb[0].mxu0
    %v237 = vadd.f32 %v168, %v236
    %v238 = vpop.f32.mrb[0].mxu0
    %239 = vdwg.mxu0
    %240 = vmax.xlane.f32.xlu0 %v237
    %v241 = vpop.xlane.xlu0 %240
    %v242 = vsub.f32 %v237, %v241
    %v243 = vmul.f32 %v242, 1.442695
    %v244 = vpow.pop %v243
    %245 = vadd.xlane.f32.xlu0 %v244
    %v246 = vpop.xlane.xlu0 %245
    %v247 = vlog2.pop %v246
    %v248 = vmul.f32 %v247, 0.6931472
    %v249 = vsub.f32 %v242, %v248
    %vm250 = vcmask 80896
    %251 = vst.msk [vmem:[#allocation8] sm:$0xff] %vm250, %v249
    // Predicated region
    $region34: #{tpu_custom_call.1} parent=1 // pred_check
      _
    $region35: #{tpu_custom_call.1} parent=1 // pred_check_branch
      %253 = sbr.rel (0) target = $region37
    $region36: #{tpu_custom_call.1} parent=1 // pred_region
      %s255 = ssub.s32 128, 128
      %256 = vsyncadd [#allocation4], %s255
      %s258 = sshll.u32 [#allocation8], 4
      %s259 = int_to_ptr.vmem [resolvable:$true] %s258
      %261 = dma.vmem_to_hbm [thread:$0]  %s259, 128, %s5, [#allocation4]
    $region37: #{tpu_custom_call.1} parent=1 // pred_fallthru
      _
    // Predicated region
    $region38: #{tpu_custom_call.1} parent=1 // pred_check
      _
    $region39: #{tpu_custom_call.1} parent=1 // pred_check_branch
      %263 = sbr.rel (0) target = $region41
    $region40: #{tpu_custom_call.1} parent=1 // pred_region
      %264 = dma.done [#allocation4], 128
    $region41: #{tpu_custom_call.1} parent=1 // pred_fallthru
      _
    %265 = vsyncpa [#allocation3], 1
    %266 = vsyncpa [#allocation6], 1
    %267 = vsyncpa [#allocation4], 1

</llo_original>
